<compile_context>
chip_gen: v7x
topology: tpu7x:2x2x1
jax: 0.10.0
libtpu: 0.0.40
codegen_flags: <defaults>
</compile_context>

<pallas_src>
import functools

import jax
import jax.numpy as jnp
from jax.experimental import pallas as pl
from jax.experimental.pallas import tpu as pltpu


def _round_up(x, m):
    return (x + m - 1) // m * m


def _vmem_budget_bytes():
    """Generation-aware VMEM budget (same number feeds the block chooser and
    vmem_limit_bytes): ~96 MiB on v5e/v6e (128 MiB phys), ~48 MiB on v7x
    (64 MiB phys per TensorCore). Falls back to the v7x-safe value."""
    cap = 64 * 1024 * 1024
    try:
        cap = int(pltpu.get_tpu_info().vmem_capacity_bytes)
    except Exception:  # not on TPU / attribute mismatch -> conservative fallback
        pass
    return min((cap * 3) // 4, 100 * 1024 * 1024)


def _choose_batch_block(B, T, H, itemsize, vmem_budget_bytes):
    """Largest batch block (multiple of 8) fitting the VMEM budget, capped so
    the grid keeps >= ~4 steps (DMA/compute overlap + megacore sharding)."""
    Hl = _round_up(H, 128)                       # in-vreg lane-padded width
    fixed = 2 * (H * H + 2 * H) * 4              # double-buffered Wt / b / v
    per_row = (
        2 * T * H * itemsize                     # double-buffered feature block
        + 2 * H * 4                              # double-buffered output block
        + 5 * T * Hl * 4                         # f32 intermediates (proj/uh/exp/
                                                 # weighted f) + possible reshape
                                                 # copy when T % 8 != 0 or bf16 in
    )
    bb = (vmem_budget_bytes - fixed) // max(per_row, 1)
    bb = int(max(8, min(bb, 1024)))
    bb = (bb // 8) * 8
    # At least ~4 grid steps when B allows: restores double-buffered overlap
    # and gives both TensorCores work on v7x via the "parallel" batch axis.
    bb = min(bb, _round_up(pl.cdiv(B, 4), 8))
    return max(bb, 8)


def _temporal_attention_kernel(f_ref, wt_ref, b_ref, v_ref, o_ref, *, tanh_dtype):
    # f_ref  : (Bb, T, H)   batch block of features, H streamed UNPADDED
    # wt_ref : (H, H)       W transposed (y = x @ Wt + b)
    # b_ref  : (1, H)       Linear bias
    # v_ref  : (1, H)       attention vector v
    # o_ref  : (Bb, H)      context output block (tiny; masked store is fine)
    Bb, T, H = f_ref.shape

    f = f_ref[...]                                   # (Bb, T, H)
    # Free view when T is a multiple of the sublane tile (8 for f32); otherwise
    # Mosaic materializes a VMEM copy (accounted for in the block chooser).
    f2 = f.reshape(Bb * T, H)

    # Projection: one (Bb*T, H) x (H, H) MXU matmul per grid step. K=N=H —
    # Mosaic lane-pads the vregs itself; no HBM padding needed.
    proj = jnp.dot(f2, wt_ref[...], preferred_element_type=jnp.float32) + b_ref[...]

    # tanh_dtype=bf16 halves EUP work on v6e/v7x when the tanh is the binding
    # slot (do NOT use on v5e: no bf16 EUP). Default f32 keeps exact math.
    uh = jnp.tanh(proj.astype(tanh_dtype)).astype(jnp.float32)   # (Bb*T, H)

    # scores = uh @ v : lane multiply + lane reduce, exact f32.
    scores = jnp.sum(uh * v_ref[...], axis=-1, keepdims=True)    # (Bb*T, 1)
    scores = scores.reshape(Bb, T, 1)

    # softmax over the time axis (torch dim=1), numerically stabilized.
    # Exact division: the denominator is only Bb elements, approximate
    # reciprocal buys nothing and would cost accuracy.
    m = jnp.max(scores, axis=1, keepdims=True)                   # (Bb, 1, 1)
    e = jnp.exp(scores - m)                                      # (Bb, T, 1)
    denom = jnp.sum(e, axis=1, keepdims=True)                    # (Bb, 1, 1)
    attn = e / denom                                             # (Bb, T, 1)

    # context = sum_t attn[b,t] * features[b,t,:]
    # NOTE: padded batch rows (zero features) produce uniform attention over
    # zero features -> context 0; they are sliced off by the wrapper.
    ctx = jnp.sum(attn * f.astype(jnp.float32), axis=1)          # (Bb, H)

    o_ref[...] = ctx.astype(o_ref.dtype)


def temporal_attention(features, W, b, v, *, tanh_dtype=jnp.float32,
                       vmem_budget_bytes=None):
    """features: (B, T, H); W: (H, H) torch nn.Linear weight; b, v: (H,)."""
    B, T, H = features.shape
    if vmem_budget_bytes is None:
        vmem_budget_bytes = _vmem_budget_bytes()

    Bb = _choose_batch_block(B, T, H, features.dtype.itemsize, vmem_budget_bytes)
    B_pad = _round_up(B, Bb)

    # Only the batch axis is padded. The hidden axis stays unpadded in HBM:
    # vreg lane padding is applied by Mosaic anyway, so HBM padding would only
    # have multiplied the streamed feature bytes (4x for H=32).
    if B_pad != B:
        features = jnp.pad(features, ((0, B_pad - B), (0, 0), (0, 0)))

    wt = W.T                    # torch nn.Linear: y = x @ W.T + b
    b2 = b.reshape(1, H)
    v2 = v.reshape(1, H)

    itemsize = features.dtype.itemsize
    cost = pl.CostEstimate(
        flops=2 * B_pad * T * H * H + 4 * B_pad * T * H,          # proj + score + ctx
        transcendentals=B_pad * T * H + B_pad * T,                # tanh + exp
        bytes_accessed=(B_pad * T * H + B_pad * H) * itemsize
        + (H * H + 2 * H) * W.dtype.itemsize,
    )

    kernel = functools.partial(_temporal_attention_kernel, tanh_dtype=tanh_dtype)

    out = pl.pallas_call(
        kernel,
        out_shape=jax.ShapeDtypeStruct((B_pad, H), features.dtype),
        grid=(B_pad // Bb,),
        in_specs=[
            # TODO(synk): if profiling on v5e shows the feature DMA exposed
            # after the pad removal, add pipeline_mode=pl.Buffered(3) here.
            pl.BlockSpec((Bb, T, H), lambda i: (i, 0, 0)),
            pl.BlockSpec((H, H), lambda i: (0, 0)),   # grid-invariant operands
            pl.BlockSpec((1, H), lambda i: (0, 0)),
            pl.BlockSpec((1, H), lambda i: (0, 0)),
        ],
        out_specs=pl.BlockSpec((Bb, H), lambda i: (i, 0)),
        compiler_params=pltpu.CompilerParams(
            dimension_semantics=("parallel",),
            vmem_limit_bytes=int(vmem_budget_bytes),
        ),
        cost_estimate=cost,
    )(features, wt, b2, v2)

    return out[:B]


def temporal_attention_ref(features, W, b, v):
    """Pure-JAX reference mirroring the PyTorch forward (HIGHEST precision)."""
    hp = jax.lax.Precision.HIGHEST
    uh = jnp.tanh(jnp.einsum("bth,kh->btk", features, W, precision=hp) + b)
    scores = jnp.einsum("bth,h->bt", uh, v, precision=hp)
    attn = jax.nn.softmax(scores, axis=1)
    return jnp.einsum("bt,bth->bh", attn, features, precision=hp)


if __name__ == "__main__":
    B, T, H = 2, 8, 32   # H == model_dim of UltimateHybridModel

    key = jax.random.PRNGKey(0)
    k_f, k_w, k_b, k_v = jax.random.split(key, 4)

    features = jax.random.normal(k_f, (B, T, H), dtype=jnp.float32)
    # nn.Linear default init ~ U(-1/sqrt(H), 1/sqrt(H)); torch.rand(H) ~ U(0,1)
    bound = 1.0 / (H ** 0.5)
    W = jax.random.uniform(k_w, (H, H), minval=-bound, maxval=bound,
                           dtype=jnp.float32)
    b = jax.random.uniform(k_b, (H,), minval=-bound, maxval=bound,
                           dtype=jnp.float32)
    v = jax.random.uniform(k_v, (H,), minval=0.0, maxval=1.0,
                           dtype=jnp.float32)

    # Softmax path is now exact (plain division); the tolerance below is slack
    # only for the MXU f32 pass-precision of the projection matmul vs. the
    # HIGHEST-precision XLA reference (observed error is far smaller).
    out = jax.block_until_ready(temporal_attention(features, W, b, v))
    ref = temporal_attention_ref(features, W, b, v)
    assert out.shape == (B, H)
    assert jnp.allclose(out, ref, atol=2e-3, rtol=2e-3), (
        f"max abs err {float(jnp.max(jnp.abs(out - ref)))}"
    )

    # Multi-step grid + padded-batch path (B not a multiple of the block).
    B2 = 37
    features2 = jax.random.normal(jax.random.fold_in(k_f, 1), (B2, T, H),
                                  dtype=jnp.float32)
    out2 = jax.block_until_ready(temporal_attention(features2, W, b, v))
    ref2 = temporal_attention_ref(features2, W, b, v)
    assert out2.shape == (B2, H)
    assert jnp.allclose(out2, ref2, atol=2e-3, rtol=2e-3), (
        f"max abs err {float(jnp.max(jnp.abs(out2 - ref2)))}"
    )

    print("KERNEL_OK")
</pallas_src>

<mosaic_0001>
module attributes {stable_mosaic.version = 11 : i64} {
  func.func @_temporal_attention_kernel(%arg0: i32, %arg1: memref<8x8x32xf32, #tpu.memory_space<vmem>>, %arg2: memref<32x32xf32, #tpu.memory_space<vmem>>, %arg3: memref<1x32xf32, #tpu.memory_space<vmem>>, %arg4: memref<1x32xf32, #tpu.memory_space<vmem>>, %arg5: memref<8x32xf32, #tpu.memory_space<vmem>>) attributes {dimension_semantics = [#tpu.dimension_semantics<parallel>], iteration_bounds = array<i64: 1>, scalar_prefetch = 0 : i64, scratch_operands = 0 : i64, tpu.core_type = #tpu.core_type<tc>, window_params = [{transform_indices = @transform_0, window_bounds = array<i64: 8, 8, 32>}, {pipeline_mode = #tpu.pipeline_mode<synchronous>, transform_indices = @transform_1, window_bounds = array<i64: 32, 32>}, {pipeline_mode = #tpu.pipeline_mode<synchronous>, transform_indices = @transform_2, window_bounds = array<i64: 1, 32>}, {pipeline_mode = #tpu.pipeline_mode<synchronous>, transform_indices = @transform_3, window_bounds = array<i64: 1, 32>}, {transform_indices = @transform_4, window_bounds = array<i64: 8, 32>}]} {
    %c0 = arith.constant 0 : index
    %c0_0 = arith.constant 0 : index
    %c0_1 = arith.constant 0 : index
    %0 = vector.load %arg1[%c0, %c0_0, %c0_1] : memref<8x8x32xf32, #tpu.memory_space<vmem>>, vector<8x8x32xf32>
    %1 = vector.shape_cast %0 : vector<8x8x32xf32> to vector<64x32xf32>
    %c0_2 = arith.constant 0 : index
    %c0_3 = arith.constant 0 : index
    %2 = vector.load %arg2[%c0_2, %c0_3] : memref<32x32xf32, #tpu.memory_space<vmem>>, vector<32x32xf32>
    %cst = arith.constant dense<0.000000e+00> : vector<64x32xf32>
    %3 = tpu.matmul %1, %2, %cst {dimension_numbers = #tpu.dot_dimension_numbers<[1], [0], [0], [1], [0, 0, 1, 1], [], []>} : vector<64x32xf32>, vector<32x32xf32>, vector<64x32xf32> -> vector<64x32xf32>
    %c0_4 = arith.constant 0 : index
    %c0_5 = arith.constant 0 : index
    %4 = vector.load %arg3[%c0_4, %c0_5] : memref<1x32xf32, #tpu.memory_space<vmem>>, vector<1x32xf32>
    %5 = vector.broadcast %4 : vector<1x32xf32> to vector<64x32xf32>
    %6 = arith.addf %3, %5 : vector<64x32xf32>
    %7 = math.tanh %6 : vector<64x32xf32>
    %c0_6 = arith.constant 0 : index
    %c0_7 = arith.constant 0 : index
    %8 = vector.load %arg4[%c0_6, %c0_7] : memref<1x32xf32, #tpu.memory_space<vmem>>, vector<1x32xf32>
    %9 = vector.broadcast %8 : vector<1x32xf32> to vector<64x32xf32>
    %10 = arith.mulf %7, %9 : vector<64x32xf32>
    %cst_8 = arith.constant dense<0.000000e+00> : vector<64xf32>
    %11 = vector.multi_reduction <add>, %10, %cst_8 [1] : vector<64x32xf32> to vector<64xf32>
    %12 = vector.shape_cast %11 : vector<64xf32> to vector<64x1xf32>
    %13 = vector.shape_cast %12 : vector<64x1xf32> to vector<8x8x1xf32>
    %cst_9 = arith.constant dense<0xFF800000> : vector<8x1xf32>
    %14 = vector.multi_reduction <maximumf>, %13, %cst_9 [1] : vector<8x8x1xf32> to vector<8x1xf32>
    %15 = vector.shape_cast %14 : vector<8x1xf32> to vector<8x1x1xf32>
    %16 = vector.broadcast %15 : vector<8x1x1xf32> to vector<8x8x1xf32>
    %17 = arith.subf %13, %16 : vector<8x8x1xf32>
    %18 = math.exp %17 : vector<8x8x1xf32>
    %cst_10 = arith.constant dense<0.000000e+00> : vector<8x1xf32>
    %19 = vector.multi_reduction <add>, %18, %cst_10 [1] : vector<8x8x1xf32> to vector<8x1xf32>
    %20 = vector.shape_cast %19 : vector<8x1xf32> to vector<8x1x1xf32>
    %21 = vector.broadcast %20 : vector<8x1x1xf32> to vector<8x8x1xf32>
    %22 = arith.divf %18, %21 : vector<8x8x1xf32>
    %23 = vector.broadcast %22 : vector<8x8x1xf32> to vector<8x8x32xf32>
    %24 = arith.mulf %23, %0 : vector<8x8x32xf32>
    %cst_11 = arith.constant dense<0.000000e+00> : vector<8x32xf32>
    %25 = vector.multi_reduction <add>, %24, %cst_11 [1] : vector<8x8x32xf32> to vector<8x32xf32>
    %c0_12 = arith.constant 0 : index
    %c0_13 = arith.constant 0 : index
    %26 = vector.load %arg5[%c0_12, %c0_13] : memref<8x32xf32, #tpu.memory_space<vmem>>, vector<8x32xf32>
    tpu.vector_store %arg5[%c0_12, %c0_13], %25 {strides = array<i32>} : memref<8x32xf32, #tpu.memory_space<vmem>>, vector<8x32xf32>,
    return
  }
  func.func @transform_0(%arg0: i32) -> (i32, i32, i32) {
    %c0_i32 = arith.constant 0 : i32
    %c0_i32_0 = arith.constant 0 : i32
    %c0_i32_1 = arith.constant 0 : i32
    return %arg0, %c0_i32, %c0_i32_0 : i32, i32, i32
  }
  func.func @transform_1(%arg0: i32) -> (i32, i32) {
    %c0_i32 = arith.constant 0 : i32
    %c0_i32_0 = arith.constant 0 : i32
    %c0_i32_1 = arith.constant 0 : i32
    return %c0_i32, %c0_i32_0 : i32, i32
  }
  func.func @transform_2(%arg0: i32) -> (i32, i32) {
    %c0_i32 = arith.constant 0 : i32
    %c0_i32_0 = arith.constant 0 : i32
    %c0_i32_1 = arith.constant 0 : i32
    return %c0_i32, %c0_i32_0 : i32, i32
  }
  func.func @transform_3(%arg0: i32) -> (i32, i32) {
    %c0_i32 = arith.constant 0 : i32
    %c0_i32_0 = arith.constant 0 : i32
    %c0_i32_1 = arith.constant 0 : i32
    return %c0_i32, %c0_i32_0 : i32, i32
  }
  func.func @transform_4(%arg0: i32) -> (i32, i32) {
    %c0_i32 = arith.constant 0 : i32
    %c0_i32_0 = arith.constant 0 : i32
    return %arg0, %c0_i32 : i32, i32
  }
}

</mosaic_0001>

<llo_original>
// kernel: tpu_custom_call.1
$region0: #{tpu_custom_call.1}
  #allocation0 [shape = 'u32[]', space=smem, size = 0x4, offset = 0x4, fixed_abs, tag = 'smem constant byte address 0x4 - core index']
  #allocation1 [shape = 'u32[144,128]{1,0:T(1,128)}', space=vmem, size = 0x12000, scoped, tag = 'internal scratch']
  %s0 = inlined_call_operand.hbm [shape: f32[8,8,32], index: 0, kind: input, shape index: {}]
  %s1 = inlined_call_operand.hbm [shape: f32[32,32], index: 1, kind: input, shape index: {}]
  %s2 = inlined_call_operand.vmem [shape: f32[1,32], index: 2, kind: input, shape index: {}]
  %s3 = inlined_call_operand.vmem [shape: f32[1,32], index: 3, kind: input, shape index: {}]
  %s4 = inlined_call_operand.hbm [shape: f32[8,32], index: 4, kind: output, shape index: {}]
  %s5 = sld [smem:[#allocation0]]
  $region34: #{tpu_custom_call.1} parent=0
    _
  %s7 = ssub.s32 1, %s5
  %s8 = scalar_select 0, %s7, %s5
  $region1: #{tpu_custom_call.1} parent=0
    #allocation2 [shape = 'u8[32768]{0}', space=vmem, size = 0x8000, scoped, tag = 'input window, operand 0, single buffered']
    #allocation3 [shape = 's32[1]{0}', space=sflag, size = 0x4, scoped, tag = 'scoped memory for tpu_custom_call.1']
    #allocation4 [shape = 's32[1]{0}', space=sflag, size = 0x4, scoped, tag = 'scoped memory for tpu_custom_call.1']
    #allocation5 [shape = 'u8[16384]{0}', space=vmem, size = 0x4000, scoped, tag = 'input window, operand 1, single buffered']
    #allocation6 [shape = 's32[1]{0}', space=sflag, size = 0x4, scoped, tag = 'scoped memory for tpu_custom_call.1']
    #allocation7 [shape = 'u8[4096]{0}', space=vmem, size = 0x1000, scoped, tag = 'output window, operand 0, single buffered']
    %9 = vsyncpa [#allocation3], 0
    %10 = vsyncpa [#allocation6], 0
    %11 = vsyncpa [#allocation4], 0
    // Predicated region
    $region2: #{tpu_custom_call.1} parent=1 // pred_check
      _
    $region3: #{tpu_custom_call.1} parent=1 // pred_check_branch
      %13 = sbr.rel (0) target = $region5
    $region4: #{tpu_custom_call.1} parent=1 // pred_region
      %s15 = ssub.s32 1024, 1024
      %16 = vsyncadd [#allocation3], %s15
      %s17 = sshll.u32 [#allocation2], 4
      %s18 = int_to_ptr.vmem [resolvable:$true] %s17
      %23 = dma.hbm_to_vmem [thread:$0]  %s0, 1024, %s18, [#allocation3], 128, 128, 8
    $region5: #{tpu_custom_call.1} parent=1 // pred_fallthru
      _
    // Predicated region
    $region6: #{tpu_custom_call.1} parent=1 // pred_check
      _
    $region7: #{tpu_custom_call.1} parent=1 // pred_check_branch
      %25 = sbr.rel (0) target = $region9
    $region8: #{tpu_custom_call.1} parent=1 // pred_region
      %s27 = ssub.s32 512, 512
      %28 = vsyncadd [#allocation6], %s27
      %s29 = sshll.u32 [#allocation5], 4
      %s30 = int_to_ptr.vmem [resolvable:$true] %s29
      %35 = dma.hbm_to_vmem [thread:$0]  %s1, 512, %s30, [#allocation6], 128, 128, 8
    $region9: #{tpu_custom_call.1} parent=1 // pred_fallthru
      _
    // Predicated region
    $region10: #{tpu_custom_call.1} parent=1 // pred_check
      _
    $region11: #{tpu_custom_call.1} parent=1 // pred_check_branch
      %37 = sbr.rel (0) target = $region13
    $region12: #{tpu_custom_call.1} parent=1 // pred_region
      _
    $region13: #{tpu_custom_call.1} parent=1 // pred_fallthru
      _
    // Predicated region
    $region14: #{tpu_custom_call.1} parent=1 // pred_check
      _
    $region15: #{tpu_custom_call.1} parent=1 // pred_check_branch
      %39 = sbr.rel (0) target = $region17
    $region16: #{tpu_custom_call.1} parent=1 // pred_region
      _
    $region17: #{tpu_custom_call.1} parent=1 // pred_fallthru
      _
    // Predicated region
    $region18: #{tpu_custom_call.1} parent=1 // pred_check
      _
    $region19: #{tpu_custom_call.1} parent=1 // pred_check_branch
      %41 = sbr.rel (0) target = $region21
    $region20: #{tpu_custom_call.1} parent=1 // pred_region
      %42 = dma.done [#allocation3], 1024
    $region21: #{tpu_custom_call.1} parent=1 // pred_fallthru
      _
    // Predicated region
    $region22: #{tpu_custom_call.1} parent=1 // pred_check
      _
    $region23: #{tpu_custom_call.1} parent=1 // pred_check_branch
      %44 = sbr.rel (0) target = $region25
    $region24: #{tpu_custom_call.1} parent=1 // pred_region
      %45 = dma.done [#allocation6], 512
    $region25: #{tpu_custom_call.1} parent=1 // pred_fallthru
      _
    %v46 = vld [vmem:[#allocation2] sm:$0xff]
    %v47 = vld [vmem:[#allocation2 + $0x8] sm:$0xff]
    %v48 = vld [vmem:[#allocation2 + $0x10] sm:$0xff]
    %v49 = vld [vmem:[#allocation2 + $0x18] sm:$0xff]
    %v50 = vld [vmem:[#allocation2 + $0x20] sm:$0xff]
    %v51 = vld [vmem:[#allocation2 + $0x28] sm:$0xff]
    %v52 = vld [vmem:[#allocation2 + $0x30] sm:$0xff]
    %v53 = vld [vmem:[#allocation2 + $0x38] sm:$0xff]
    %v54 = vld [vmem:[#allocation5] sm:$0xff]
    %v55 = vld [vmem:[#allocation5 + $0x8] sm:$0xff]
    %v56 = vld [vmem:[#allocation5 + $0x10] sm:$0xff]
    %v57 = vld [vmem:[#allocation5 + $0x18] sm:$0xff]
    %v58 = vld [vmem:[%s2] sm:$0x1]
    %v60 = vlaneseq
    %v61 = vshrl.u32 %v60, 7
    %v62 = vsub.s32 0, %v61
    %v63 = vrot.slane %v58, %v62
    %vm65 = vcmask 261120
    %v67 = vsel %vm65, %v46, 0
    %v70 = vsel %vm65, %v47, 0
    %v73 = vsel %vm65, %v48, 0
    %v76 = vsel %vm65, %v49, 0
    %v79 = vsel %vm65, %v50, 0
    %v82 = vsel %vm65, %v51, 0
    %v85 = vsel %vm65, %v52, 0
    %v88 = vsel %vm65, %v53, 0
    %90 = vmatprep.subr.mxu0 0.0
    %91 = vmatpush1.msra.mxu0 %v54
    %92 = vmatprep.subr.mxu0 0.0
    %93 = vmatpush1.msra.mxu0 %v55
    %94 = vmatprep.subr.mxu0 0.0
    %95 = vmatpush1.msra.mxu0 %v56
    %96 = vmatprep.subr.mxu0 0.0
    %97 = vmatpush1.msra.mxu0 %v57
    %98 = vmatprep.subr.mxu0 0.0
    %99 = vmatpush1.msra.mxu0 0.0
    %100 = vmatprep.subr.mxu0 0.0
    %101 = vmatpush1.msra.mxu0 0.0
    %102 = vmatprep.subr.mxu0 0.0
    %103 = vmatpush1.msra.mxu0 0.0
    %104 = vmatprep.subr.mxu0 0.0
    %105 = vmatpush1.msra.mxu0 0.0
    %106 = vmatprep.subr.mxu0 0.0
    %107 = vmatpush1.msra.mxu0 0.0
    %108 = vmatprep.subr.mxu0 0.0
    %109 = vmatpush1.msra.mxu0 0.0
    %110 = vmatprep.subr.mxu0 0.0
    %111 = vmatpush1.msra.mxu0 0.0
    %112 = vmatprep.subr.mxu0 0.0
    %113 = vmatpush1.msra.mxu0 0.0
    %114 = vmatprep.subr.mxu0 0.0
    %115 = vmatpush1.msra.mxu0 0.0
    %116 = vmatprep.subr.mxu0 0.0
    %117 = vmatpush1.msra.mxu0 0.0
    %118 = vmatprep.subr.mxu0 0.0
    %119 = vmatpush1.msra.mxu0 0.0
    %120 = vmatprep.subr.mxu0 0.0
    %121 = vmatpush1.msra.mxu0 0.0
    %122 = vmatprep.subr.mxu0 0.0
    %123 = vmatpush1.msra.mxu0 0.0
    %124 = vmatprep.subr.mxu0 0.0
    %125 = vmatpush1.msra.mxu0 0.0
    %126 = vmatprep.subr.mxu0 0.0
    %127 = vmatpush1.msra.mxu0 0.0
    %128 = vmatprep.subr.mxu0 0.0
    %129 = vmatpush1.msra.mxu0 0.0
    %130 = vmatprep.subr.mxu0 0.0
    %131 = vmatpush1.msra.mxu0 0.0
    %132 = vmatprep.subr.mxu0 0.0
    %133 = vmatpush1.msra.mxu0 0.0
    %134 = vmatprep.subr.mxu0 0.0
    %135 = vmatpush1.msra.mxu0 0.0
    %136 = vmatprep.subr.mxu0 0.0
    %137 = vmatpush1.msra.mxu0 0.0
    %138 = vmatprep.subr.mxu0 0.0
    %139 = vmatpush1.msra.mxu0 0.0
    %140 = vmatprep.subr.mxu0 0.0
    %141 = vmatpush1.msra.mxu0 0.0
    %142 = vmatprep.subr.mxu0 0.0
    %143 = vmatpush1.msra.mxu0 0.0
    %144 = vmatprep.subr.mxu0 0.0
    %145 = vmatpush1.msra.mxu0 0.0
    %146 = vmatprep.subr.mxu0 0.0
    %147 = vmatpush1.msra.mxu0 0.0
    %148 = vmatprep.subr.mxu0 0.0
    %149 = vmatpush1.msra.mxu0 0.0
    %150 = vmatprep.subr.mxu0 0.0
    %151 = vmatpush1.msra.mxu0 0.0
    %152 = vmatprep.subr.mxu0 0.0
    %153 = vmatpush1.msra.mxu0 0.0
    %154 = vmatprep.mubr.f32.mxu0 0.0
    %155 = vmatmul.mubr.f32.gmra.mrb[0].mxu0 %v67
    %v156 = vpop.f32.mrb[0].mxu0
    %v157 = vadd.f32 %v63, %v156
    %v158 = vpop.f32.mrb[0].mxu0
    %159 = vmatprep.mubr.f32.mxu0 0.0
    %160 = vmatmul.mubr.f32.gmra.mrb[0].mxu0 %v70
    %v161 = vpop.f32.mrb[0].mxu0
    %v162 = vadd.f32 %v63, %v161
    %v163 = vpop.f32.mrb[0].mxu0
    %164 = vmatprep.mubr.f32.mxu0 0.0
    %165 = vmatmul.mubr.f32.gmra.mrb[0].mxu0 %v73
    %v166 = vpop.f32.mrb[0].mxu0
    %v167 = vadd.f32 %v63, %v166
    %v168 = vpop.f32.mrb[0].mxu0
    %169 = vmatprep.mubr.f32.mxu0 0.0
    %170 = vmatmul.mubr.f32.gmra.mrb[0].mxu0 %v76
    %v171 = vpop.f32.mrb[0].mxu0
    %v172 = vadd.f32 %v63, %v171
    %v173 = vpop.f32.mrb[0].mxu0
    %174 = vmatprep.mubr.f32.mxu0 0.0
    %175 = vmatmul.mubr.f32.gmra.mrb[0].mxu0 %v79
    %v176 = vpop.f32.mrb[0].mxu0
    %v177 = vadd.f32 %v63, %v176
    %v178 = vpop.f32.mrb[0].mxu0
    %179 = vmatprep.mubr.f32.mxu0 0.0
    %180 = vmatmul.mubr.f32.gmra.mrb[0].mxu0 %v82
    %v181 = vpop.f32.mrb[0].mxu0
    %v182 = vadd.f32 %v63, %v181
    %v183 = vpop.f32.mrb[0].mxu0
    %184 = vmatprep.mubr.f32.mxu0 0.0
    %185 = vmatmul.mubr.f32.gmra.mrb[0].mxu0 %v85
    %v186 = vpop.f32.mrb[0].mxu0
    %v187 = vadd.f32 %v63, %v186
    %v188 = vpop.f32.mrb[0].mxu0
    %189 = vmatprep.mubr.f32.mxu0 0.0
    %190 = vmatmul.mubr.f32.gmra.mrb[0].mxu0 %v88
    %v191 = vpop.f32.mrb[0].mxu0
    %v192 = vadd.f32 %v63, %v191
    %v193 = vpop.f32.mrb[0].mxu0
    %194 = vdwg.mxu0
    %v195 = vtanh.pop %v157
    %v196 = vtanh.pop %v162
    %v197 = vtanh.pop %v167
    %v198 = vtanh.pop %v172
    %v199 = vtanh.pop %v177
    %v200 = vtanh.pop %v182
    %v201 = vtanh.pop %v187
    %v202 = vtanh.pop %v192
    %v203 = vld [vmem:[%s3] sm:$0x1]
    %v205 = vlaneseq
    %v206 = vshrl.u32 %v205, 7
    %v207 = vsub.s32 0, %v206
    %v208 = vrot.slane %v203, %v207
    %v210 = vmul.f32 %v195, %v208
    %v211 = vmul.f32 %v196, %v208
    %v212 = vmul.f32 %v197, %v208
    %v213 = vmul.f32 %v198, %v208
    %v214 = vmul.f32 %v199, %v208
    %v215 = vmul.f32 %v200, %v208
    %v216 = vmul.f32 %v201, %v208
    %v217 = vmul.f32 %v202, %v208
    %v218 = vsel %vm65, %v210, 0.0
    %219 = vadd.xlane.f32.xlu0 %v218
    %v220 = vpop.xlane.xlu0 %219
    %v221 = vsel %vm65, %v211, 0.0
    %222 = vadd.xlane.f32.xlu0 %v221
    %v223 = vpop.xlane.xlu0 %222
    %v224 = vsel %vm65, %v212, 0.0
    %225 = vadd.xlane.f32.xlu0 %v224
    %v226 = vpop.xlane.xlu0 %225
    %v227 = vsel %vm65, %v213, 0.0
    %228 = vadd.xlane.f32.xlu0 %v227
    %v229 = vpop.xlane.xlu0 %228
    %v230 = vsel %vm65, %v214, 0.0
    %231 = vadd.xlane.f32.xlu0 %v230
    %v232 = vpop.xlane.xlu0 %231
    %v233 = vsel %vm65, %v215, 0.0
    %234 = vadd.xlane.f32.xlu0 %v233
    %v235 = vpop.xlane.xlu0 %234
    %v236 = vsel %vm65, %v216, 0.0
    %237 = vadd.xlane.f32.xlu0 %v236
    %v238 = vpop.xlane.xlu0 %237
    %v239 = vsel %vm65, %v217, 0.0
    %240 = vadd.xlane.f32.xlu0 %v239
    %v241 = vpop.xlane.xlu0 %240
    %v242 = vrot.slane %v220, 4
    %v243 = vmax.f32 %v220, %v242
    %v244 = vrot.slane %v243, 2
    %v245 = vmax.f32 %v243, %v244
    %v246 = vrot.slane %v245, 1
    %v247 = vmax.f32 %v245, %v246
    %v248 = vrot.slane %v223, 4
    %v249 = vmax.f32 %v223, %v248
    %v250 = vrot.slane %v249, 2
    %v251 = vmax.f32 %v249, %v250
    %v252 = vrot.slane %v251, 1
    %v253 = vmax.f32 %v251, %v252
    %v254 = vrot.slane %v226, 4
    %v255 = vmax.f32 %v226, %v254
    %v256 = vrot.slane %v255, 2
    %v257 = vmax.f32 %v255, %v256
    %v258 = vrot.slane %v257, 1
    %v259 = vmax.f32 %v257, %v258
    %v260 = vrot.slane %v229, 4
    %v261 = vmax.f32 %v229, %v260
    %v262 = vrot.slane %v261, 2
    %v263 = vmax.f32 %v261, %v262
    %v264 = vrot.slane %v263, 1
    %v265 = vmax.f32 %v263, %v264
    %v266 = vrot.slane %v232, 4
    %v267 = vmax.f32 %v232, %v266
    %v268 = vrot.slane %v267, 2
    %v269 = vmax.f32 %v267, %v268
    %v270 = vrot.slane %v269, 1
    %v271 = vmax.f32 %v269, %v270
    %v272 = vrot.slane %v235, 4
    %v273 = vmax.f32 %v235, %v272
    %v274 = vrot.slane %v273, 2
    %v275 = vmax.f32 %v273, %v274
    %v276 = vrot.slane %v275, 1
    %v277 = vmax.f32 %v275, %v276
    %v278 = vrot.slane %v238, 4
    %v279 = vmax.f32 %v238, %v278
    %v280 = vrot.slane %v279, 2
    %v281 = vmax.f32 %v279, %v280
    %v282 = vrot.slane %v281, 1
    %v283 = vmax.f32 %v281, %v282
    %v284 = vrot.slane %v241, 4
    %v285 = vmax.f32 %v241, %v284
    %v286 = vrot.slane %v285, 2
    %v287 = vmax.f32 %v285, %v286
    %v288 = vrot.slane %v287, 1
    %v289 = vmax.f32 %v287, %v288
    %v290 = vsub.f32 %v220, %v247
    %v291 = vsub.f32 %v223, %v253
    %v292 = vsub.f32 %v226, %v259
    %v293 = vsub.f32 %v229, %v265
    %v294 = vsub.f32 %v232, %v271
    %v295 = vsub.f32 %v235, %v277
    %v296 = vsub.f32 %v238, %v283
    %v297 = vsub.f32 %v241, %v289
    %v298 = vmul.f32 %v290, 1.442695
    %v299 = vpow.pop %v298
    %v300 = vmul.f32 %v291, 1.442695
    %v301 = vpow.pop %v300
    %v302 = vmul.f32 %v292, 1.442695
    %v303 = vpow.pop %v302
    %v304 = vmul.f32 %v293, 1.442695
    %v305 = vpow.pop %v304
    %v306 = vmul.f32 %v294, 1.442695
    %v307 = vpow.pop %v306
    %v308 = vmul.f32 %v295, 1.442695
    %v309 = vpow.pop %v308
    %v310 = vmul.f32 %v296, 1.442695
    %v311 = vpow.pop %v310
    %v312 = vmul.f32 %v297, 1.442695
    %v313 = vpow.pop %v312
    %v314 = vrot.slane %v299, 4
    %v315 = vadd.f32 %v299, %v314
    %v316 = vrot.slane %v315, 2
    %v317 = vadd.f32 %v315, %v316
    %v318 = vrot.slane %v317, 1
    %v319 = vadd.f32 %v317, %v318
    %v320 = vrot.slane %v301, 4
    %v321 = vadd.f32 %v301, %v320
    %v322 = vrot.slane %v321, 2
    %v323 = vadd.f32 %v321, %v322
    %v324 = vrot.slane %v323, 1
    %v325 = vadd.f32 %v323, %v324
    %v326 = vrot.slane %v303, 4
    %v327 = vadd.f32 %v303, %v326
    %v328 = vrot.slane %v327, 2
    %v329 = vadd.f32 %v327, %v328
    %v330 = vrot.slane %v329, 1
    %v331 = vadd.f32 %v329, %v330
    %v332 = vrot.slane %v305, 4
    %v333 = vadd.f32 %v305, %v332
    %v334 = vrot.slane %v333, 2
    %v335 = vadd.f32 %v333, %v334
    %v336 = vrot.slane %v335, 1
    %v337 = vadd.f32 %v335, %v336
    %v338 = vrot.slane %v307, 4
    %v339 = vadd.f32 %v307, %v338
    %v340 = vrot.slane %v339, 2
    %v341 = vadd.f32 %v339, %v340
    %v342 = vrot.slane %v341, 1
    %v343 = vadd.f32 %v341, %v342
    %v344 = vrot.slane %v309, 4
    %v345 = vadd.f32 %v309, %v344
    %v346 = vrot.slane %v345, 2
    %v347 = vadd.f32 %v345, %v346
    %v348 = vrot.slane %v347, 1
    %v349 = vadd.f32 %v347, %v348
    %v350 = vrot.slane %v311, 4
    %v351 = vadd.f32 %v311, %v350
    %v352 = vrot.slane %v351, 2
    %v353 = vadd.f32 %v351, %v352
    %v354 = vrot.slane %v353, 1
    %v355 = vadd.f32 %v353, %v354
    %v356 = vrot.slane %v313, 4
    %v357 = vadd.f32 %v313, %v356
    %v358 = vrot.slane %v357, 2
    %v359 = vadd.f32 %v357, %v358
    %v360 = vrot.slane %v359, 1
    %v361 = vadd.f32 %v359, %v360
    %v362 = vrcp.pop %v319
    %v363 = vmul.f32 %v299, %v362
    %v364 = vrcp.pop %v325
    %v365 = vmul.f32 %v301, %v364
    %v366 = vrcp.pop %v331
    %v367 = vmul.f32 %v303, %v366
    %v368 = vrcp.pop %v337
    %v369 = vmul.f32 %v305, %v368
    %v370 = vrcp.pop %v343
    %v371 = vmul.f32 %v307, %v370
    %v372 = vrcp.pop %v349
    %v373 = vmul.f32 %v309, %v372
    %v374 = vrcp.pop %v355
    %v375 = vmul.f32 %v311, %v374
    %v376 = vrcp.pop %v361
    %v377 = vmul.f32 %v313, %v376
    %v378 = vmul.f32 %v363, %v46
    %v379 = vmul.f32 %v365, %v47
    %v380 = vmul.f32 %v367, %v48
    %v381 = vmul.f32 %v369, %v49
    %v382 = vmul.f32 %v371, %v50
    %v383 = vmul.f32 %v373, %v51
    %v384 = vmul.f32 %v375, %v52
    %v385 = vmul.f32 %v377, %v53
    %v386 = vsel %vm65, %v378, 0.0
    %v387 = vrot.slane %v386, 4
    %v388 = vadd.f32 %v386, %v387
    %v389 = vrot.slane %v388, 2
    %v390 = vadd.f32 %v388, %v389
    %v391 = vrot.slane %v390, 1
    %v392 = vadd.f32 %v390, %v391
    %v393 = vsel %vm65, %v379, 0.0
    %v394 = vrot.slane %v393, 4
    %v395 = vadd.f32 %v393, %v394
    %v396 = vrot.slane %v395, 2
    %v397 = vadd.f32 %v395, %v396
    %v398 = vrot.slane %v397, 1
    %v399 = vadd.f32 %v397, %v398
    %v400 = vsel %vm65, %v380, 0.0
    %v401 = vrot.slane %v400, 4
    %v402 = vadd.f32 %v400, %v401
    %v403 = vrot.slane %v402, 2
    %v404 = vadd.f32 %v402, %v403
    %v405 = vrot.slane %v404, 1
    %v406 = vadd.f32 %v404, %v405
    %v407 = vsel %vm65, %v381, 0.0
    %v408 = vrot.slane %v407, 4
    %v409 = vadd.f32 %v407, %v408
    %v410 = vrot.slane %v409, 2
    %v411 = vadd.f32 %v409, %v410
    %v412 = vrot.slane %v411, 1
    %v413 = vadd.f32 %v411, %v412
    %v414 = vsel %vm65, %v382, 0.0
    %v415 = vrot.slane %v414, 4
    %v416 = vadd.f32 %v414, %v415
    %v417 = vrot.slane %v416, 2
    %v418 = vadd.f32 %v416, %v417
    %v419 = vrot.slane %v418, 1
    %v420 = vadd.f32 %v418, %v419
    %v421 = vsel %vm65, %v383, 0.0
    %v422 = vrot.slane %v421, 4
    %v423 = vadd.f32 %v421, %v422
    %v424 = vrot.slane %v423, 2
    %v425 = vadd.f32 %v423, %v424
    %v426 = vrot.slane %v425, 1
    %v427 = vadd.f32 %v425, %v426
    %v428 = vsel %vm65, %v384, 0.0
    %v429 = vrot.slane %v428, 4
    %v430 = vadd.f32 %v428, %v429
    %v431 = vrot.slane %v430, 2
    %v432 = vadd.f32 %v430, %v431
    %v433 = vrot.slane %v432, 1
    %v434 = vadd.f32 %v432, %v433
    %v435 = vsel %vm65, %v385, 0.0
    %v436 = vrot.slane %v435, 4
    %v437 = vadd.f32 %v435, %v436
    %v438 = vrot.slane %v437, 2
    %v439 = vadd.f32 %v437, %v438
    %v440 = vrot.slane %v439, 1
    %v441 = vadd.f32 %v439, %v440
    %vm450 = vcmask 1041409
    %v451 = vsel %vm450, %v399, %v392
    %vm452 = vcmask 1042434
    %v453 = vsel %vm452, %v406, %v451
    %vm454 = vcmask 1043459
    %v455 = vsel %vm454, %v413, %v453
    %vm456 = vcmask 1044484
    %v457 = vsel %vm456, %v420, %v455
    %vm458 = vcmask 1045509
    %v459 = vsel %vm458, %v427, %v457
    %vm460 = vcmask 1046534
    %v461 = vsel %vm460, %v434, %v459
    %vm462 = vcmask 1047559
    %v463 = vsel %vm462, %v441, %v461
    %465 = vst.msk [vmem:[#allocation7] sm:$0xff] %vm65, %v463
    // Predicated region
    $region26: #{tpu_custom_call.1} parent=1 // pred_check
      _
    $region27: #{tpu_custom_call.1} parent=1 // pred_check_branch
      %467 = sbr.rel (0) target = $region29
    $region28: #{tpu_custom_call.1} parent=1 // pred_region
      %s469 = ssub.s32 128, 128
      %470 = vsyncadd [#allocation4], %s469
      %s472 = sshll.u32 [#allocation7], 4
      %s473 = int_to_ptr.vmem [resolvable:$true] %s472
      %475 = dma.vmem_to_hbm [thread:$0]  %s473, 128, %s4, [#allocation4]
    $region29: #{tpu_custom_call.1} parent=1 // pred_fallthru
      _
    // Predicated region
    $region30: #{tpu_custom_call.1} parent=1 // pred_check
      _
    $region31: #{tpu_custom_call.1} parent=1 // pred_check_branch
      %477 = sbr.rel (0) target = $region33
    $region32: #{tpu_custom_call.1} parent=1 // pred_region
      %478 = dma.done [#allocation4], 128
    $region33: #{tpu_custom_call.1} parent=1 // pred_fallthru
      _
    %479 = vsyncpa [#allocation3], 1
    %480 = vsyncpa [#allocation6], 1
    %481 = vsyncpa [#allocation4], 1

</llo_original>
